<compile_context>
chip_gen: v5e
topology: v5e:2x2
jax: 0.10.0
libtpu: 0.0.40
codegen_flags: <defaults>
</compile_context>

<pallas_src>
import functools

import jax
import jax.numpy as jnp
from jax.experimental import pallas as pl
from jax.experimental.pallas import tpu as pltpu

NEG_INF_SCORE = -100000000.0


def _round_up(x, m):
    return ((x + m - 1) // m) * m


# ----------------------------------------------------------------- kernel 1 --
def _masked_max_kernel(seq_ref, bias_ref, mx_ref):
    """Masked max over time, streamed over T tiles (reduction axis)."""
    t = pl.program_id(0)

    @pl.when(t == 0)
    def _init():
        mx_ref[...] = jnp.full(mx_ref.shape, -jnp.inf, dtype=mx_ref.dtype)

    # Additive -1e8 bias on masked positions: equivalent to masked_fill + max
    # whenever each row has >= 1 unmasked position.
    masked = seq_ref[...] + bias_ref[...]                      # [B, tT, H]
    mx_ref[...] = jnp.maximum(mx_ref[...], jnp.max(masked, axis=1))


# ----------------------------------------------------------------- kernel 2 --
def _bridge_matmul_kernel(mx_ref, w_ref, b_ref, out_ref, *, num_out_tiles):
    """One N tile of the fused (output ++ features) linear + activation."""
    j = pl.program_id(0)
    x = mx_ref[...].astype(jnp.bfloat16)                       # [B, H] bf16
    y = jnp.dot(x, w_ref[...], preferred_element_type=jnp.float32)
    y = y + b_ref[...]                                         # f32 [B, tile_n]

    @pl.when(j < num_out_tiles)        # input2output region -> GELU (exact erf)
    def _gelu():
        out_ref[...] = jax.nn.gelu(y, approximate=False)

    @pl.when(j >= num_out_tiles)       # input2features region -> Sigmoid
    def _sigmoid():
        out_ref[...] = jax.nn.sigmoid(y)


# ------------------------------------------------------------------- params --
def init_encoder_bridge_params(key, hidden_size, num_source_features,
                               num_decoder_layers):
    """Deterministic synthetic params; weights stored [in, out] in bf16."""
    out_dim = 2 * hidden_size * num_decoder_layers
    k1, k2, k3, k4 = jax.random.split(key, 4)
    params = {
        "w_out": (jax.random.normal(k1, (hidden_size, out_dim), jnp.float32)
                  * 0.02).astype(jnp.bfloat16),
        "b_out": jax.random.normal(k2, (1, out_dim), jnp.float32) * 0.02,
    }
    if num_source_features > 0:
        params["w_feat"] = (jax.random.normal(
            k3, (hidden_size, num_source_features), jnp.float32)
            * 0.02).astype(jnp.bfloat16)
        params["b_feat"] = jax.random.normal(
            k4, (1, num_source_features), jnp.float32) * 0.02
    return params


def pack_bridge_params(params, num_source_features, tile_n=512):
    """One-time packing: concat [w_out | w_feat] along N, pad to tile_n."""
    w_out = params["w_out"]                       # bf16 [H, out_dim]
    b_out = params["b_out"]                       # f32  [1, out_dim]
    H, out_dim = w_out.shape
    tile_n = min(tile_n, _round_up(out_dim, 128))
    out_dim_pad = _round_up(out_dim, tile_n)

    w_parts = [w_out, jnp.zeros((H, out_dim_pad - out_dim), w_out.dtype)]
    b_parts = [b_out, jnp.zeros((1, out_dim_pad - out_dim), b_out.dtype)]
    n_total = out_dim_pad
    if num_source_features > 0:
        w_feat, b_feat = params["w_feat"], params["b_feat"]
        F = w_feat.shape[1]
        feat_pad = _round_up(F, tile_n)
        w_parts += [w_feat, jnp.zeros((H, feat_pad - F), w_feat.dtype)]
        b_parts += [b_feat, jnp.zeros((1, feat_pad - F), b_feat.dtype)]
        n_total += feat_pad

    return {
        "w_packed": jnp.concatenate(w_parts, axis=1),   # bf16 [H, n_total]
        "b_packed": jnp.concatenate(b_parts, axis=1),   # f32  [1, n_total]
        "tile_n": tile_n,
        "out_dim": out_dim,
        "out_dim_pad": out_dim_pad,
        "n_total": n_total,
        "num_out_tiles": out_dim_pad // tile_n,
        "num_source_features": num_source_features,
    }


# ------------------------------------------------------------------ forward --
def encoder_bridge_forward(packed, sequences, mask):
    """sequences: [B, T, H] f32; mask: [B, T] bool/int (nonzero = masked)."""
    B, T, H = sequences.shape
    tile_n = packed["tile_n"]
    n_total = packed["n_total"]
    out_dim = packed["out_dim"]
    out_dim_pad = packed["out_dim_pad"]
    num_source_features = packed["num_source_features"]

    # ---- pass 1: masked max over time (stream T) -------------------------
    mask_bias = (mask.astype(jnp.float32) * NEG_INF_SCORE)[:, :, None]  # [B,T,1]
    tile_t = T
    for cand in (512, 256, 128):
        if T % cand == 0:
            tile_t = cand
            break

    mx = pl.pallas_call(
        _masked_max_kernel,
        out_shape=jax.ShapeDtypeStruct((B, H), jnp.float32),
        grid=(T // tile_t,),
        in_specs=[
            pl.BlockSpec((B, tile_t, H), lambda t: (0, t, 0)),
            pl.BlockSpec((B, tile_t, 1), lambda t: (0, t, 0)),
        ],
        out_specs=pl.BlockSpec((B, H), lambda t: (0, 0)),
        compiler_params=pltpu.CompilerParams(
            dimension_semantics=("arbitrary",)),
    )(sequences, mask_bias)

    # ---- pass 2: fused, N-tiled matmul + activations ----------------------
    kernel = functools.partial(_bridge_matmul_kernel,
                               num_out_tiles=packed["num_out_tiles"])
    out_full = pl.pallas_call(
        kernel,
        out_shape=jax.ShapeDtypeStruct((B, n_total), jnp.float32),
        grid=(n_total // tile_n,),
        in_specs=[
            pl.BlockSpec((B, H), lambda j: (0, 0)),        # max_over_time
            pl.BlockSpec((H, tile_n), lambda j: (0, j)),   # packed weights
            pl.BlockSpec((1, tile_n), lambda j: (0, j)),   # packed biases
        ],
        out_specs=pl.BlockSpec((B, tile_n), lambda j: (0, j)),
        compiler_params=pltpu.CompilerParams(
            dimension_semantics=("parallel",),             # v7x 2-TC split
            vmem_limit_bytes=32 * 1024 * 1024),
    )(mx, packed["w_packed"], packed["b_packed"])

    output = out_full[:, :out_dim]
    if num_source_features > 0:
        feats = out_full[:, out_dim_pad:out_dim_pad + num_source_features]
    else:
        feats = None
    return {"output": output, "feature_scores": feats}


# ---------------------------------------------------------------- reference --
def _reference_forward(params, sequences, mask, num_source_features):
    """Pure-JAX reference (exact masked_fill semantics, bf16 MXU numerics)."""
    m = mask.astype(bool)[:, :, None]
    masked = jnp.where(m, jnp.float32(NEG_INF_SCORE), sequences)
    mx = jnp.max(masked, axis=1).astype(jnp.bfloat16)
    out = jax.nn.gelu(
        jnp.dot(mx, params["w_out"], preferred_element_type=jnp.float32)
        + params["b_out"], approximate=False)
    feat = None
    if num_source_features > 0:
        feat = jax.nn.sigmoid(
            jnp.dot(mx, params["w_feat"], preferred_element_type=jnp.float32)
            + params["b_feat"])
    return out, feat


if __name__ == "__main__":
    B, T = 2, 8
    hidden_size = 32
    num_source_features = 4
    num_decoder_layers = 2

    key = jax.random.PRNGKey(0)
    k_seq, k_mask, k_params = jax.random.split(key, 3)

    sequences = jax.random.normal(k_seq, (B, T, hidden_size), jnp.float32)
    # mask: True/nonzero -> position masked out. Keep >=1 unmasked per row.
    mask = (jax.random.uniform(k_mask, (B, T)) > 0.7)
    mask = mask.at[:, 0].set(False)

    raw = init_encoder_bridge_params(
        k_params, hidden_size, num_source_features, num_decoder_layers)
    packed = pack_bridge_params(raw, num_source_features)

    result = encoder_bridge_forward(packed, sequences, mask)
    out = jax.block_until_ready(result["output"])
    feat = jax.block_until_ready(result["feature_scores"])

    ref_out, ref_feat = _reference_forward(
        raw, sequences, mask, num_source_features)
    assert out.shape == (B, 2 * hidden_size * num_decoder_layers)
    assert feat.shape == (B, num_source_features)
    assert jnp.allclose(out, ref_out, atol=1e-3, rtol=1e-3)
    assert jnp.allclose(feat, ref_feat, atol=1e-3, rtol=1e-3)

    # Also exercise the no-features configuration.
    raw0 = init_encoder_bridge_params(
        k_params, hidden_size, 0, num_decoder_layers)
    packed0 = pack_bridge_params(raw0, 0)
    result0 = encoder_bridge_forward(packed0, sequences, mask)
    out0 = jax.block_until_ready(result0["output"])
    ref_out0, _ = _reference_forward(raw0, sequences, mask, 0)
    assert result0["feature_scores"] is None
    assert jnp.allclose(out0, ref_out0, atol=1e-3, rtol=1e-3)

    print("KERNEL_OK")
</pallas_src>

<mosaic_0001>
module attributes {stable_mosaic.version = 11 : i64} {
  func.func @_masked_max_kernel(%arg0: i32, %arg1: memref<2x8x32xf32, #tpu.memory_space<vmem>>, %arg2: memref<2x8x1xf32, #tpu.memory_space<vmem>>, %arg3: memref<2x32xf32, #tpu.memory_space<vmem>>) attributes {dimension_semantics = [#tpu.dimension_semantics<arbitrary>], iteration_bounds = array<i64: 1>, scalar_prefetch = 0 : i64, scratch_operands = 0 : i64, tpu.core_type = #tpu.core_type<tc>, window_params = [{transform_indices = @transform_0, window_bounds = array<i64: 2, 8, 32>}, {transform_indices = @transform_1, window_bounds = array<i64: 2, 8, 1>}, {pipeline_mode = #tpu.pipeline_mode<synchronous>, transform_indices = @transform_2, window_bounds = array<i64: 2, 32>}]} {
    %c0_i32 = arith.constant 0 : i32
    %0 = arith.cmpi eq, %arg0, %c0_i32 : i32
    %1 = arith.extui %0 : i1 to i32
    %c0_i32_0 = arith.constant 0 : i32
    %2 = arith.cmpi ne, %1, %c0_i32_0 : i32
    scf.if %2 {
      %cst_10 = arith.constant 0xFF800000 : f32
      %11 = vector.broadcast %cst_10 : f32 to vector<2x32xf32>
      %c0_11 = arith.constant 0 : index
      %c0_12 = arith.constant 0 : index
      %12 = vector.load %arg3[%c0_11, %c0_12] : memref<2x32xf32, #tpu.memory_space<vmem>>, vector<2x32xf32>
      tpu.vector_store %arg3[%c0_11, %c0_12], %11 {strides = array<i32>} : memref<2x32xf32, #tpu.memory_space<vmem>>, vector<2x32xf32>,
    } else {
    }
    %c0 = arith.constant 0 : index
    %c0_1 = arith.constant 0 : index
    %c0_2 = arith.constant 0 : index
    %3 = vector.load %arg1[%c0, %c0_1, %c0_2] : memref<2x8x32xf32, #tpu.memory_space<vmem>>, vector<2x8x32xf32>
    %c0_3 = arith.constant 0 : index
    %c0_4 = arith.constant 0 : index
    %c0_5 = arith.constant 0 : index
    %4 = vector.load %arg2[%c0_3, %c0_4, %c0_5] : memref<2x8x1xf32, #tpu.memory_space<vmem>>, vector<2x8x1xf32>
    %5 = vector.broadcast %4 : vector<2x8x1xf32> to vector<2x8x32xf32>
    %6 = arith.addf %3, %5 : vector<2x8x32xf32>
    %c0_6 = arith.constant 0 : index
    %c0_7 = arith.constant 0 : index
    %7 = vector.load %arg3[%c0_6, %c0_7] : memref<2x32xf32, #tpu.memory_space<vmem>>, vector<2x32xf32>
    %cst = arith.constant dense<0xFF800000> : vector<2x32xf32>
    %8 = vector.multi_reduction <maximumf>, %6, %cst [1] : vector<2x8x32xf32> to vector<2x32xf32>
    %9 = arith.maximumf %7, %8 : vector<2x32xf32>
    %c0_8 = arith.constant 0 : index
    %c0_9 = arith.constant 0 : index
    %10 = vector.load %arg3[%c0_8, %c0_9] : memref<2x32xf32, #tpu.memory_space<vmem>>, vector<2x32xf32>
    tpu.vector_store %arg3[%c0_8, %c0_9], %9 {strides = array<i32>} : memref<2x32xf32, #tpu.memory_space<vmem>>, vector<2x32xf32>,
    return
  }
  func.func @transform_0(%arg0: i32) -> (i32, i32, i32) {
    %c0_i32 = arith.constant 0 : i32
    %c0_i32_0 = arith.constant 0 : i32
    %c0_i32_1 = arith.constant 0 : i32
    return %c0_i32, %arg0, %c0_i32_0 : i32, i32, i32
  }
  func.func @transform_1(%arg0: i32) -> (i32, i32, i32) {
    %c0_i32 = arith.constant 0 : i32
    %c0_i32_0 = arith.constant 0 : i32
    %c0_i32_1 = arith.constant 0 : i32
    return %c0_i32, %arg0, %c0_i32_0 : i32, i32, i32
  }
  func.func @transform_2(%arg0: i32) -> (i32, i32) {
    %c0_i32 = arith.constant 0 : i32
    %c0_i32_0 = arith.constant 0 : i32
    %c0_i32_1 = arith.constant 0 : i32
    return %c0_i32, %c0_i32_0 : i32, i32
  }
}

</mosaic_0001>

<llo_original>
// kernel: tpu_custom_call.1
$region0: #{tpu_custom_call.1}
  #allocation0 [shape = 'u32[]', space=smem, size = 0x4, offset = 0x4, fixed_abs, tag = 'smem constant byte address 0x4 - core index']
  #allocation1 [shape = 'u32[72,128]{1,0:T(1,128)}', space=vmem, size = 0x9000, scoped, tag = 'internal scratch']
  %s0 = inlined_call_operand.vmem [shape: f32[2,8,32], index: 0, kind: input, shape index: {}]
  %s1 = inlined_call_operand.vmem [shape: f32[2,8,1], index: 1, kind: input, shape index: {}]
  %s2 = inlined_call_operand.hbm [shape: f32[2,32], index: 2, kind: output, shape index: {}]
  %s3 = sld [smem:[#allocation0]]
  $region22: #{tpu_custom_call.1} parent=0
    _
  %s5 = ssub.s32 1, %s3
  %s6 = scalar_select 0, %s5, %s3
  $region1: #{tpu_custom_call.1} parent=0
    #allocation2 [shape = 'u8[1024]{0}', space=vmem, size = 0x400, scoped, tag = 'output window, operand 0, single buffered']
    #allocation3 [shape = 's32[1]{0}', space=sflag, size = 0x4, scoped, tag = 'scoped memory for tpu_custom_call.1']
    %7 = vsyncpa [#allocation3], 0
    // Predicated region
    $region2: #{tpu_custom_call.1} parent=1 // pred_check
      _
    $region3: #{tpu_custom_call.1} parent=1 // pred_check_branch
      %9 = sbr.rel (0) target = $region5
    $region4: #{tpu_custom_call.1} parent=1 // pred_region
      _
    $region5: #{tpu_custom_call.1} parent=1 // pred_fallthru
      _
    // Predicated region
    $region6: #{tpu_custom_call.1} parent=1 // pred_check
      _
    $region7: #{tpu_custom_call.1} parent=1 // pred_check_branch
      %11 = sbr.rel (0) target = $region9
    $region8: #{tpu_custom_call.1} parent=1 // pred_region
      _
    $region9: #{tpu_custom_call.1} parent=1 // pred_fallthru
      _
    %p12 = scmp.eq.s32.totalorder 0, 0
    // Predicated region
    $region10: #{tpu_custom_call.1} parent=1 // pred_check
      %p13 = pneg %p12
    $region11: #{tpu_custom_call.1} parent=1 // pred_check_branch
      %15 = sbr.rel (%p13) target = $region13
    $region12: #{tpu_custom_call.1} parent=1 // pred_region
      %vm16 = vcmask 254976
      %17 = vst.msk [vmem:[#allocation2] sm:$0x3] %vm16, -inf
    $region13: #{tpu_custom_call.1} parent=1 // pred_fallthru
      _
    %v18 = vld [vmem:[%s0] sm:$0xff]
    %v19 = vld [vmem:[%s0 + $0x8] sm:$0xff]
    %v20 = vld [vmem:[%s1] sm:$0xff]
    %v21 = vld [vmem:[%s1 + $0x8] sm:$0xff]
    %23 = vset.pattern.permute.xlu0 0
    %24 = vperm.xlu0 %23, %v20
    %v25 = vpop.permute.xlu0 %24
    %28 = vset.pattern.permute.xlu0 0
    %29 = vperm.xlu0 %28, %v21
    %v30 = vpop.permute.xlu0 %29
    %v32 = vadd.f32 %v18, %v25
    %v33 = vadd.f32 %v19, %v30
    %v34 = vld [vmem:[#allocation2] sm:$0x3]
    %vm35 = vcmask 261120
    %v36 = vsel %vm35, %v32, -inf
    %v37 = vrot.slane %v36, 4
    %v38 = vmax.f32 %v36, %v37
    %v39 = vrot.slane %v38, 2
    %v40 = vmax.f32 %v38, %v39
    %v41 = vrot.slane %v40, 1
    %v42 = vmax.f32 %v40, %v41
    %v43 = vsel %vm35, %v33, -inf
    %v44 = vrot.slane %v43, 4
    %v45 = vmax.f32 %v43, %v44
    %v46 = vrot.slane %v45, 2
    %v47 = vmax.f32 %v45, %v46
    %v48 = vrot.slane %v47, 1
    %v49 = vmax.f32 %v47, %v48
    %vm52 = vcmask 1041409
    %v53 = vsel %vm52, %v49, %v42
    %v55 = vmax.f32 %v34, %v53
    %vm56 = vcmask 254976
    %57 = vst.msk [vmem:[#allocation2] sm:$0x3] %vm56, %v55
    // Predicated region
    $region14: #{tpu_custom_call.1} parent=1 // pred_check
      _
    $region15: #{tpu_custom_call.1} parent=1 // pred_check_branch
      %59 = sbr.rel (0) target = $region17
    $region16: #{tpu_custom_call.1} parent=1 // pred_region
      %61 = vsyncadd [#allocation3], 0
      %s63 = sshll.u32 [#allocation2], 4
      %s64 = int_to_ptr.vmem [resolvable:$true] %s63
      %s65 = sshll.u32 %s2, 4
      %s66 = int_to_ptr.hbm [resolvable:$true] %s65
      %68 = dma.vmem_to_hbm [thread:$0]  %s64, 32, %s66, [#allocation3]
    $region17: #{tpu_custom_call.1} parent=1 // pred_fallthru
      _
    // Predicated region
    $region18: #{tpu_custom_call.1} parent=1 // pred_check
      _
    $region19: #{tpu_custom_call.1} parent=1 // pred_check_branch
      %70 = sbr.rel (0) target = $region21
    $region20: #{tpu_custom_call.1} parent=1 // pred_region
      %72 = dma.done [#allocation3], 32
    $region21: #{tpu_custom_call.1} parent=1 // pred_fallthru
      _
    %73 = vsyncpa [#allocation3], 1

</llo_original>
